<compile_context>
chip_gen: v7x
topology: tpu7x:2x2x1
jax: 0.10.0
libtpu: 0.0.40
codegen_flags: <defaults>
</compile_context>

<pallas_src>
import math

import jax
import jax.numpy as jnp
from jax.experimental import pallas as pl
from jax.experimental.pallas import tpu as pltpu


def _attn_kernel(q_ref, k_ref, v_ref, o_ref, p_ref):
    # One block = a fold of Bb batch elements: (Bb, Lq, D) / (Bb, Lk, D).
    q = q_ref[...]          # keep input dtype; MXU takes bf16/f32 natively
    k = k_ref[...]
    v = v_ref[...]

    d_k = q.shape[-1]
    inv_sqrt_dk = jnp.float32(1.0 / math.sqrt(d_k))

    # scores = q @ k^T / sqrt(d_k)  -> (Bb, Lq, Lk).
    # einsum contracts D without materializing k.T, f32 accumulation on MXU.
    scores = jnp.einsum("bqd,bkd->bqk", q, k,
                        preferred_element_type=jnp.float32) * inv_sqrt_dk

    # TODO(synk): the reference's `mask` is undefined (treated as None) and the
    # `score = tanh(matmul(key))` line is dead/broken, so neither is emitted;
    # dropout defaults to 0.0 -> identity and is omitted.

    # Numerically stable softmax in f32.  Normalization is deferred: compute
    # the unnormalized e @ v first, then scale by 1/denom (Lq*D multiplies
    # instead of Lq*Lk), with the reciprocal on the EUP slot (approx=True).
    m = jnp.max(scores, axis=-1, keepdims=True)
    e = jnp.exp(scores - m)                                   # (Bb, Lq, Lk) f32
    denom = jnp.sum(e, axis=-1, keepdims=True)
    inv_denom = pl.reciprocal(denom, approx=True)

    pv = jnp.einsum("bqk,bkd->bqd", e.astype(v.dtype), v,
                    preferred_element_type=jnp.float32)       # (Bb, Lq, D)

    o_ref[...] = (pv * inv_denom).astype(o_ref.dtype)
    # p_attn is part of the module's return contract, so it is materialized.
    # NOTE: for small Lk (<128 lanes) this store is a masked partial store;
    # callers that don't consume p_attn should drop this output (~2x less HBM
    # write traffic).
    p_ref[...] = (e * inv_denom).astype(p_ref.dtype)


def _pick_block_b(B, Lq, Lk, D, itemsize, vmem_budget_bytes=16 * 1024 * 1024):
    """Largest batch fold whose double-buffered block footprint fits the budget,
    preferring >= 2 grid steps so both v7x TensorCores get parallel work."""
    def block_bytes(bb):
        per_b = (Lq * D) + 2 * (Lk * D) + (Lq * D) + (Lq * Lk)   # q, k, v, out, p
        return 2 * bb * per_b * itemsize                          # x2 double buffer

    divisors = [d for d in range(1, B + 1) if B % d == 0]
    fits = [d for d in divisors if block_bytes(d) <= vmem_budget_bytes] or [1]
    two_step = [d for d in fits if B // d >= 2]
    return max(two_step) if two_step else max(fits)


@jax.jit
def word_attention(query, key, value):
    """query: [B, Lq, D], key/value: [B, Lk, D]
    -> (out [B, Lq, D], p_attn [B, Lq, Lk])"""
    B, Lq, D = query.shape
    _, Lk, _ = key.shape

    bb = _pick_block_b(B, Lq, Lk, D, jnp.dtype(query.dtype).itemsize)
    grid = (B // bb,)

    out_shapes = (
        jax.ShapeDtypeStruct((B, Lq, D), query.dtype),
        jax.ShapeDtypeStruct((B, Lq, Lk), query.dtype),
    )

    grid_spec = pltpu.PrefetchScalarGridSpec(
        num_scalar_prefetch=0,
        grid=grid,
        in_specs=[
            pl.BlockSpec((bb, Lq, D), lambda b: (b, 0, 0)),
            pl.BlockSpec((bb, Lk, D), lambda b: (b, 0, 0)),
            pl.BlockSpec((bb, Lk, D), lambda b: (b, 0, 0)),
        ],
        out_specs=[
            pl.BlockSpec((bb, Lq, D), lambda b: (b, 0, 0)),
            pl.BlockSpec((bb, Lq, Lk), lambda b: (b, 0, 0)),
        ],
    )

    return pl.pallas_call(
        _attn_kernel,
        out_shape=out_shapes,
        grid_spec=grid_spec,
        compiler_params=pltpu.CompilerParams(
            dimension_semantics=("parallel",),
            # Allow bigger batch folds than the conservative scoped defaults
            # (16 MiB on v5e / 32 MiB on v6e).  This is a cap, not an
            # allocation, so it is also harmless on v7x where the actual
            # footprint here is tiny.
            vmem_limit_bytes=64 * 1024 * 1024,
        ),
    )(query, key, value)


def _reference(query, key, value):
    d_k = query.shape[-1]
    scores = jnp.einsum("bqd,bkd->bqk", query, key) / math.sqrt(d_k)
    p = jax.nn.softmax(scores, axis=-1)
    return jnp.einsum("bqk,bkd->bqd", p, value), p


if __name__ == "__main__":
    # Small deterministic shapes: batch=8 (folded 4-per-block -> 2 parallel
    # grid steps), q_len=8, key_len=16, dim=32.
    B, Lq, Lk, D = 8, 8, 16, 32
    key0 = jax.random.PRNGKey(0)
    kq, kk, kv = jax.random.split(key0, 3)
    query = jax.random.normal(kq, (B, Lq, D), dtype=jnp.float32)
    key_ = jax.random.normal(kk, (B, Lk, D), dtype=jnp.float32)
    value = jax.random.normal(kv, (B, Lk, D), dtype=jnp.float32)

    out, p_attn = word_attention(query, key_, value)
    jax.block_until_ready((out, p_attn))

    ref_out, ref_p = _reference(query, key_, value)
    # Tolerance accounts for the EUP approximate reciprocal used in the
    # deferred softmax normalization (tiny relative deviation in 1/denom).
    assert jnp.allclose(out, ref_out, atol=1e-2, rtol=1e-2)
    assert jnp.allclose(p_attn, ref_p, atol=1e-2, rtol=1e-2)

    print("KERNEL_OK")
</pallas_src>

<mosaic_0001>
module attributes {stable_mosaic.version = 11 : i64} {
  func.func @_attn_kernel(%arg0: i32, %arg1: memref<4x8x32xf32, #tpu.memory_space<vmem>>, %arg2: memref<4x16x32xf32, #tpu.memory_space<vmem>>, %arg3: memref<4x16x32xf32, #tpu.memory_space<vmem>>, %arg4: memref<4x8x32xf32, #tpu.memory_space<vmem>>, %arg5: memref<4x8x16xf32, #tpu.memory_space<vmem>>) attributes {dimension_semantics = [#tpu.dimension_semantics<parallel>], iteration_bounds = array<i64: 2>, scalar_prefetch = 0 : i64, scratch_operands = 0 : i64, tpu.core_type = #tpu.core_type<tc>, window_params = [{transform_indices = @transform_0, window_bounds = array<i64: 4, 8, 32>}, {transform_indices = @transform_1, window_bounds = array<i64: 4, 16, 32>}, {transform_indices = @transform_2, window_bounds = array<i64: 4, 16, 32>}, {transform_indices = @transform_3, window_bounds = array<i64: 4, 8, 32>}, {transform_indices = @transform_4, window_bounds = array<i64: 4, 8, 16>}]} {
    %c0 = arith.constant 0 : index
    %c0_0 = arith.constant 0 : index
    %c0_1 = arith.constant 0 : index
    %0 = vector.load %arg1[%c0, %c0_0, %c0_1] : memref<4x8x32xf32, #tpu.memory_space<vmem>>, vector<4x8x32xf32>
    %c0_2 = arith.constant 0 : index
    %c0_3 = arith.constant 0 : index
    %c0_4 = arith.constant 0 : index
    %1 = vector.load %arg2[%c0_2, %c0_3, %c0_4] : memref<4x16x32xf32, #tpu.memory_space<vmem>>, vector<4x16x32xf32>
    %c0_5 = arith.constant 0 : index
    %c0_6 = arith.constant 0 : index
    %c0_7 = arith.constant 0 : index
    %2 = vector.load %arg3[%c0_5, %c0_6, %c0_7] : memref<4x16x32xf32, #tpu.memory_space<vmem>>, vector<4x16x32xf32>
    "tpu.trace_start"() <{level = 10 : i32, message = "bqd,bkd->bqk"}> : () -> ()
    %cst = arith.constant dense<0.000000e+00> : vector<4x8x16xf32>
    %3 = tpu.matmul %0, %1, %cst {dimension_numbers = #tpu.dot_dimension_numbers<[2], [2], [1], [1], [0, 0, 0, 1, 1, 1], [0], [0]>} : vector<4x8x32xf32>, vector<4x16x32xf32>, vector<4x8x16xf32> -> vector<4x8x16xf32>
    "tpu.trace_stop"() : () -> ()
    %cst_8 = arith.constant 0.176776692 : f32
    %4 = vector.broadcast %cst_8 : f32 to vector<4x8x16xf32>
    %5 = arith.mulf %3, %4 : vector<4x8x16xf32>
    %cst_9 = arith.constant dense<0xFF800000> : vector<4x8xf32>
    %6 = vector.multi_reduction <maximumf>, %5, %cst_9 [2] : vector<4x8x16xf32> to vector<4x8xf32>
    %7 = vector.shape_cast %6 : vector<4x8xf32> to vector<4x8x1xf32>
    %8 = vector.broadcast %7 : vector<4x8x1xf32> to vector<4x8x16xf32>
    %9 = arith.subf %5, %8 : vector<4x8x16xf32>
    %10 = math.exp %9 : vector<4x8x16xf32>
    %cst_10 = arith.constant dense<0.000000e+00> : vector<4x8xf32>
    %11 = vector.multi_reduction <add>, %10, %cst_10 [2] : vector<4x8x16xf32> to vector<4x8xf32>
    %12 = vector.shape_cast %11 : vector<4x8xf32> to vector<4x8x1xf32>
    %13 = tpu.reciprocal %12 {approx = true} : vector<4x8x1xf32> -> vector<4x8x1xf32>
    "tpu.trace_start"() <{level = 10 : i32, message = "bqk,bkd->bqd"}> : () -> ()
    %cst_11 = arith.constant dense<0.000000e+00> : vector<4x8x32xf32>
    %14 = tpu.matmul %10, %2, %cst_11 {dimension_numbers = #tpu.dot_dimension_numbers<[2], [1], [1], [2], [0, 0, 0, 1, 1, 2], [0], [0]>} : vector<4x8x16xf32>, vector<4x16x32xf32>, vector<4x8x32xf32> -> vector<4x8x32xf32>
    "tpu.trace_stop"() : () -> ()
    %15 = vector.broadcast %13 : vector<4x8x1xf32> to vector<4x8x32xf32>
    %16 = arith.mulf %14, %15 : vector<4x8x32xf32>
    %c0_12 = arith.constant 0 : index
    %c0_13 = arith.constant 0 : index
    %c0_14 = arith.constant 0 : index
    %17 = vector.load %arg4[%c0_12, %c0_13, %c0_14] : memref<4x8x32xf32, #tpu.memory_space<vmem>>, vector<4x8x32xf32>
    tpu.vector_store %arg4[%c0_12, %c0_13, %c0_14], %16 {strides = array<i32>} : memref<4x8x32xf32, #tpu.memory_space<vmem>>, vector<4x8x32xf32>,
    %18 = vector.broadcast %13 : vector<4x8x1xf32> to vector<4x8x16xf32>
    %19 = arith.mulf %10, %18 : vector<4x8x16xf32>
    %c0_15 = arith.constant 0 : index
    %c0_16 = arith.constant 0 : index
    %c0_17 = arith.constant 0 : index
    %20 = vector.load %arg5[%c0_15, %c0_16, %c0_17] : memref<4x8x16xf32, #tpu.memory_space<vmem>>, vector<4x8x16xf32>
    tpu.vector_store %arg5[%c0_15, %c0_16, %c0_17], %19 {strides = array<i32>} : memref<4x8x16xf32, #tpu.memory_space<vmem>>, vector<4x8x16xf32>,
    return
  }
  func.func @transform_0(%arg0: i32) -> (i32, i32, i32) {
    %c0_i32 = arith.constant 0 : i32
    %c0_i32_0 = arith.constant 0 : i32
    %c0_i32_1 = arith.constant 0 : i32
    return %arg0, %c0_i32, %c0_i32_0 : i32, i32, i32
  }
  func.func @transform_1(%arg0: i32) -> (i32, i32, i32) {
    %c0_i32 = arith.constant 0 : i32
    %c0_i32_0 = arith.constant 0 : i32
    %c0_i32_1 = arith.constant 0 : i32
    return %arg0, %c0_i32, %c0_i32_0 : i32, i32, i32
  }
  func.func @transform_2(%arg0: i32) -> (i32, i32, i32) {
    %c0_i32 = arith.constant 0 : i32
    %c0_i32_0 = arith.constant 0 : i32
    %c0_i32_1 = arith.constant 0 : i32
    return %arg0, %c0_i32, %c0_i32_0 : i32, i32, i32
  }
  func.func @transform_3(%arg0: i32) -> (i32, i32, i32) {
    %c0_i32 = arith.constant 0 : i32
    %c0_i32_0 = arith.constant 0 : i32
    %c0_i32_1 = arith.constant 0 : i32
    return %arg0, %c0_i32, %c0_i32_0 : i32, i32, i32
  }
  func.func @transform_4(%arg0: i32) -> (i32, i32, i32) {
    %c0_i32 = arith.constant 0 : i32
    %c0_i32_0 = arith.constant 0 : i32
    %c0_i32_1 = arith.constant 0 : i32
    return %arg0, %c0_i32, %c0_i32_0 : i32, i32, i32
  }
}

</mosaic_0001>

<llo_original>
// kernel: word_attention.1
$region0: #{word_attention.1}
  #allocation0 [shape = 'u32[]', space=smem, size = 0x4, offset = 0x4, fixed_abs, tag = 'smem constant byte address 0x4 - core index']
  #allocation1 [shape = 'u32[144,128]{1,0:T(1,128)}', space=vmem, size = 0x12000, scoped, tag = 'internal scratch']
  %s0 = inlined_call_operand.hbm [shape: f32[8,8,32], index: 0, kind: input, shape index: {}]
  %s1 = inlined_call_operand.hbm [shape: f32[8,16,32], index: 1, kind: input, shape index: {}]
  %s2 = inlined_call_operand.hbm [shape: f32[8,16,32], index: 2, kind: input, shape index: {}]
  %s3 = inlined_call_operand.hbm [shape: f32[8,8,32], index: 3, kind: output, shape index: {0}]
  %s4 = inlined_call_operand.hbm [shape: f32[8,8,16], index: 4, kind: output, shape index: {1}]
  %5 = xla_tuple %s3, %s4
  %s6 = sld [smem:[#allocation0]]
  $region65: #{word_attention.1} parent=0
    _
  %s8 = ssub.s32 1, %s6
  %s9 = scalar_select 0, %s8, %s6
  $region1: #{word_attention.1} parent=0
    #allocation2 [shape = 'u8[32768]{0}', space=vmem, size = 0x8000, scoped, tag = 'input window, operand 0']
    #allocation3 [shape = 's32[2]{0}', space=sflag, size = 0x8, scoped, tag = 'scoped memory for word_attention.1']
    #allocation4 [shape = 's32[2]{0}', space=sflag, size = 0x8, scoped, tag = 'scoped memory for word_attention.1']
    #allocation5 [shape = 'u8[65536]{0}', space=vmem, size = 0x10000, scoped, tag = 'input window, operand 1']
    #allocation6 [shape = 's32[2]{0}', space=sflag, size = 0x8, scoped, tag = 'scoped memory for word_attention.1']
    #allocation7 [shape = 'u8[65536]{0}', space=vmem, size = 0x10000, scoped, tag = 'input window, operand 2']
    #allocation8 [shape = 'u8[32768]{0}', space=vmem, size = 0x8000, scoped, tag = 'output window, operand 0']
    #allocation9 [shape = 'u8[32768]{0}', space=vmem, size = 0x8000, scoped, tag = 'output window, operand 1']
    #allocation10 [shape = 's32[2]{0}', space=sflag, size = 0x8, scoped, tag = 'scoped memory for word_attention.1']
    %10 = vsyncpa [#allocation3], 0
    %s11 = scalar_lea.sflag [#allocation3], 1
    %12 = vsyncpa %s11, 0
    %13 = vsyncpa [#allocation6], 0
    %s14 = scalar_lea.sflag [#allocation6], 1
    %15 = vsyncpa %s14, 0
    %16 = vsyncpa [#allocation4], 0
    %s17 = scalar_lea.sflag [#allocation4], 1
    %18 = vsyncpa %s17, 0
    %19 = vsyncpa [#allocation10], 0
    %s20 = scalar_lea.sflag [#allocation10], 1
    %21 = vsyncpa %s20, 0
    loop: start=0, step=1, limit=4
    $region2: #{word_attention.1} parent=1 // loop_pre_header
      _
    $region3: #{word_attention.1} parent=1 // loop_header
      %s23 = sphi 0, %s27
      %p24 = scmp.ge.s32.totalorder %s23, 4
      %s33 = sphi 0, %s35
      %s36 = sphi 0, %s33
      %s37 = sphi 0, %s36
      %s53 = sphi 0, %s37
      %s59 = sphi 0, %s61
      %s62 = sphi 0, %s59
      %s63 = sphi 0, %s62
      %s79 = sphi 0, %s63
      %s85 = sphi 0, %s87
      %s88 = sphi 0, %s85
      %s89 = sphi 0, %s88
      %s105 = sphi 0, %s89
      %s111 = sphi 0, %s113
      %s114 = sphi 0, %s111
      %s115 = sphi 0, %s114
      %s131 = sphi 0, %s115
      %s137 = sphi 0, %s139
      %s140 = sphi 0, %s137
      %s141 = sphi 0, %s140
      %s157 = sphi 0, %s141
    $region4: #{word_attention.1} parent=1 // loop_header_branch
      %26 = sbr.rel (%p24) target = $region8
    $region5: #{word_attention.1} parent=1 // loop_body
      %s28 = ssub.s32 %s23, 1
      %s29 = ssub.s32 %s23, 2
      %s30 = sadd.s32 %s23, 1
      %s31 = ssub.s32 %s23, %s30
      %p32 = scmp.eq.s32.totalorder %s31, 0
      %s34 = sadd.s32 %s33, 1
      %s35 = scalar_select %p32, %s33, %s34
      %p38 = pneg %p32
      %p39 = scmp.eq.s32.totalorder %s23, 1
      %p40 = por %p38, %p39
      %p41 = scmp.ne.s32.totalorder %s33, %s36
      %p42 = scmp.eq.s32.totalorder %s23, 0
      %p43 = por %p41, %p42
      %p44 = scmp.ne.s32.totalorder %s33, %s36
      %p45 = scmp.eq.s32.totalorder %s28, 1
      %p46 = por %p44, %p45
      %p47 = scmp.ne.s32.totalorder %s36, %s37
      %p48 = scmp.eq.s32.totalorder %s28, 0
      %p49 = por %p47, %p48
      %p50 = scmp.ne.s32.totalorder %s36, %s37
      %p51 = scmp.eq.s32.totalorder %s29, 1
      %p52 = por %p50, %p51
      %p54 = scmp.ne.s32.totalorder %s37, %s53
      %p55 = scmp.eq.s32.totalorder %s29, 0
      %p56 = por %p54, %p55
      %s57 = ssub.s32 %s23, %s30
      %p58 = scmp.eq.s32.totalorder %s57, 0
      %s60 = sadd.s32 %s59, 1
      %s61 = scalar_select %p58, %s59, %s60
      %p64 = pneg %p58
      %p65 = scmp.eq.s32.totalorder %s23, 1
      %p66 = por %p64, %p65
      %p67 = scmp.ne.s32.totalorder %s59, %s62
      %p68 = scmp.eq.s32.totalorder %s23, 0
      %p69 = por %p67, %p68
      %p70 = scmp.ne.s32.totalorder %s59, %s62
      %p71 = scmp.eq.s32.totalorder %s28, 1
      %p72 = por %p70, %p71
      %p73 = scmp.ne.s32.totalorder %s62, %s63
      %p74 = scmp.eq.s32.totalorder %s28, 0
      %p75 = por %p73, %p74
      %p76 = scmp.ne.s32.totalorder %s62, %s63
      %p77 = scmp.eq.s32.totalorder %s29, 1
      %p78 = por %p76, %p77
      %p80 = scmp.ne.s32.totalorder %s63, %s79
      %p81 = scmp.eq.s32.totalorder %s29, 0
      %p82 = por %p80, %p81
      %s83 = ssub.s32 %s23, %s30
      %p84 = scmp.eq.s32.totalorder %s83, 0
      %s86 = sadd.s32 %s85, 1
      %s87 = scalar_select %p84, %s85, %s86
      %p90 = pneg %p84
      %p91 = scmp.eq.s32.totalorder %s23, 1
      %p92 = por %p90, %p91
      %p93 = scmp.ne.s32.totalorder %s85, %s88
      %p94 = scmp.eq.s32.totalorder %s23, 0
      %p95 = por %p93, %p94
      %p96 = scmp.ne.s32.totalorder %s85, %s88
      %p97 = scmp.eq.s32.totalorder %s28, 1
      %p98 = por %p96, %p97
      %p99 = scmp.ne.s32.totalorder %s88, %s89
      %p100 = scmp.eq.s32.totalorder %s28, 0
      %p101 = por %p99, %p100
      %p102 = scmp.ne.s32.totalorder %s88, %s89
      %p103 = scmp.eq.s32.totalorder %s29, 1
      %p104 = por %p102, %p103
      %p106 = scmp.ne.s32.totalorder %s89, %s105
      %p107 = scmp.eq.s32.totalorder %s29, 0
      %p108 = por %p106, %p107
      %s109 = ssub.s32 %s23, %s30
      %p110 = scmp.eq.s32.totalorder %s109, 0
      %s112 = sadd.s32 %s111, 1
      %s113 = scalar_select %p110, %s111, %s112
      %p116 = pneg %p110
      %p117 = scmp.eq.s32.totalorder %s23, 1
      %p118 = por %p116, %p117
      %p119 = scmp.ne.s32.totalorder %s111, %s114
      %p120 = scmp.eq.s32.totalorder %s23, 0
      %p121 = por %p119, %p120
      %p122 = scmp.ne.s32.totalorder %s111, %s114
      %p123 = scmp.eq.s32.totalorder %s28, 1
      %p124 = por %p122, %p123
      %p125 = scmp.ne.s32.totalorder %s114, %s115
      %p126 = scmp.eq.s32.totalorder %s28, 0
      %p127 = por %p125, %p126
      %p128 = scmp.ne.s32.totalorder %s114, %s115
      %p129 = scmp.eq.s32.totalorder %s29, 1
      %p130 = por %p128, %p129
      %p132 = scmp.ne.s32.totalorder %s115, %s131
      %p133 = scmp.eq.s32.totalorder %s29, 0
      %p134 = por %p132, %p133
      %s135 = ssub.s32 %s23, %s30
      %p136 = scmp.eq.s32.totalorder %s135, 0
      %s138 = sadd.s32 %s137, 1
      %s139 = scalar_select %p136, %s137, %s138
      %p142 = pneg %p136
      %p143 = scmp.eq.s32.totalorder %s23, 1
      %p144 = por %p142, %p143
      %p145 = scmp.ne.s32.totalorder %s137, %s140
      %p146 = scmp.eq.s32.totalorder %s23, 0
      %p147 = por %p145, %p146
      %p148 = scmp.ne.s32.totalorder %s137, %s140
      %p149 = scmp.eq.s32.totalorder %s28, 1
      %p150 = por %p148, %p149
      %p151 = scmp.ne.s32.totalorder %s140, %s141
      %p152 = scmp.eq.s32.totalorder %s28, 0
      %p153 = por %p151, %p152
      %p154 = scmp.ne.s32.totalorder %s140, %s141
      %p155 = scmp.eq.s32.totalorder %s29, 1
      %p156 = por %p154, %p155
      %p158 = scmp.ne.s32.totalorder %s141, %s157
      %p159 = scmp.eq.s32.totalorder %s29, 0
      %p160 = por %p158, %p159
      %p161 = scmp.le.s32.totalorder 1, %s23
      %p162 = scmp.lt.s32.totalorder %s23, 3
      %p163 = pnand %p161, %p162
      %p164 = pneg %p163
      // Predicated region
      $region9: #{word_attention.1} parent=5 // pred_check
        _
      $region10: #{word_attention.1} parent=5 // pred_check_branch
        %166 = sbr.rel (%p163) target = $region12
      $region11: #{word_attention.1} parent=5 // pred_region
        %s167 = ssub.s32 %s23, 1
      $region12: #{word_attention.1} parent=5 // pred_fallthru
        _
      %p168 = scmp.lt.s32.totalorder %s23, 2
      // Predicated region
      $region13: #{word_attention.1} parent=5 // pred_check
        %p169 = pneg %p168
      $region14: #{word_attention.1} parent=5 // pred_check_branch
        %171 = sbr.rel (%p169) target = $region16
      $region15: #{word_attention.1} parent=5 // pred_region
        // Predicated region
        $region17: #{word_attention.1} parent=15 // pred_check
          %p172 = pneg %p43
        $region18: #{word_attention.1} parent=15 // pred_check_branch
          %174 = sbr.rel (%p172) target = $region20
        $region19: #{word_attention.1} parent=15 // pred_region
          %s175 = sand.u32 %s33, 1
          %s176 = scalar_lea.sflag [#allocation3], %s175
          %s177 = sand.u32 %s33, 1
          %s178 = smul.addr %s177, 32
          %s179 = scalar_lea.vmem [#allocation2], %s178
          %s180 = smul.u32 4, %s23
          %s182 = ssub.s32 512, 512
          %183 = vsyncadd %s176, %s182
          %s184 = smul.addr %s180, 128
          %s185 = scalar_lea.hbm %s0, %s184
          %s186 = sshll.u32 %s179, 4
          %s187 = int_to_ptr.vmem [resolvable:$true] %s186
          %192 = dma.hbm_to_vmem [thread:$0]  %s185, 512, %s187, %s176, 128, 128, 8
        $region20: #{word_attention.1} parent=15 // pred_fallthru
          _
        // Predicated region
        $region21: #{word_attention.1} parent=15 // pred_check
          %p193 = pneg %p69
        $region22: #{word_attention.1} parent=15 // pred_check_branch
          %195 = sbr.rel (%p193) target = $region24
        $region23: #{word_attention.1} parent=15 // pred_region
          %s196 = sand.u32 %s23, 1
          %s197 = scalar_lea.sflag [#allocation6], %s196
          %s198 = sand.u32 %s59, 1
          %s199 = smul.addr %s198, 64
          %s200 = scalar_lea.vmem [#allocation5], %s199
          %s201 = smul.u32 4, %s23
          %s203 = ssub.s32 1024, 1024
          %204 = vsyncadd %s197, %s203
          %s205 = smul.addr %s201, 2
          %s206 = smul.addr %s205, 128
          %s207 = scalar_lea.hbm %s1, %s206
          %s208 = sshll.u32 %s200, 4
          %s209 = int_to_ptr.vmem [resolvable:$true] %s208
          %214 = dma.hbm_to_vmem [thread:$0]  %s207, 1024, %s209, %s197, 128, 128, 8
        $region24: #{word_attention.1} parent=15 // pred_fallthru
          _
        // Predicated region
        $region25: #{word_attention.1} parent=15 // pred_check
          %p215 = pneg %p95
        $region26: #{word_attention.1} parent=15 // pred_check_branch
          %217 = sbr.rel (%p215) target = $region28
        $region27: #{word_attention.1} parent=15 // pred_region
          %s218 = sand.u32 %s23, 1
          %s219 = scalar_lea.sflag [#allocation6], %s218
          %s220 = sand.u32 %s85, 1
          %s221 = smul.addr %s220, 64
          %s222 = scalar_lea.vmem [#allocation7], %s221
          %s223 = smul.u32 4, %s23
          %s225 = ssub.s32 1024, 1024
          %226 = vsyncadd %s219, %s225
          %s227 = smul.addr %s223, 2
          %s228 = smul.addr %s227, 128
          %s229 = scalar_lea.hbm %s2, %s228
          %s230 = sshll.u32 %s222, 4
          %s231 = int_to_ptr.vmem [resolvable:$true] %s230
          %236 = dma.hbm_to_vmem [thread:$0]  %s229, 1024, %s231, %s219, 128, 128, 8
        $region28: #{word_attention.1} parent=15 // pred_fallthru
          _
      $region16: #{word_attention.1} parent=5 // pred_fallthru
        _
      %p237 = scmp.le.s32.totalorder 1, %s23
      %p238 = scmp.lt.s32.totalorder %s23, 3
      %p239 = pnand %p237, %p238
      %p240 = pneg %p239
      // Predicated region
      $region29: #{word_attention.1} parent=5 // pred_check
        _
      $region30: #{word_attention.1} parent=5 // pred_check_branch
        %242 = sbr.rel (%p239) target = $region32
      $region31: #{word_attention.1} parent=5 // pred_region
        %s243 = ssub.s32 %s23, 1
        %s244 = sand.u32 %s36, 1
        %s245 = scalar_lea.sflag [#allocation3], %s244
        %s246 = sand.u32 %s36, 1
        %s247 = smul.addr %s246, 32
        %s248 = scalar_lea.vmem [#allocation2], %s247
        // Predicated region
        $region33: #{word_attention.1} parent=31 // pred_check
          %p249 = pneg %p49
        $region34: #{word_attention.1} parent=31 // pred_check_branch
          %251 = sbr.rel (%p249) target = $region36
        $region35: #{word_attention.1} parent=31 // pred_region
          %252 = dma.done %s245, 512
        $region36: #{word_attention.1} parent=31 // pred_fallthru
          _
        %s253 = sand.u32 %s28, 1
        %s254 = scalar_lea.sflag [#allocation6], %s253
        %s255 = sand.u32 %s62, 1
        %s256 = smul.addr %s255, 64
        %s257 = scalar_lea.vmem [#allocation5], %s256
        // Predicated region
        $region37: #{word_attention.1} parent=31 // pred_check
          %p258 = pneg %p75
        $region38: #{word_attention.1} parent=31 // pred_check_branch
          %260 = sbr.rel (%p258) target = $region40
        $region39: #{word_attention.1} parent=31 // pred_region
          %261 = dma.done %s254, 1024
        $region40: #{word_attention.1} parent=31 // pred_fallthru
          _
        %s262 = sand.u32 %s28, 1
        %s263 = scalar_lea.sflag [#allocation6], %s262
        %s264 = sand.u32 %s88, 1
        %s265 = smul.addr %s264, 64
        %s266 = scalar_lea.vmem [#allocation7], %s265
        // Predicated region
        $region41: #{word_attention.1} parent=31 // pred_check
          %p267 = pneg %p101
        $region42: #{word_attention.1} parent=31 // pred_check_branch
          %269 = sbr.rel (%p267) target = $region44
        $region43: #{word_attention.1} parent=31 // pred_region
          %270 = dma.done %s263, 1024
        $region44: #{word_attention.1} parent=31 // pred_fallthru
          _
        %s271 = sand.u32 %s36, 1
        %s272 = scalar_lea.sflag [#allocation3], %s271
        %s273 = sand.u32 %s36, 1
        %s274 = smul.addr %s273, 32
        %s275 = scalar_lea.vmem [#allocation2], %s274
        %p276 = pneg %p49
        %p277 = pneg %p46
        %s278 = sand.u32 %s28, 1
        %s279 = scalar_lea.sflag [#allocation6], %s278
        %s280 = sand.u32 %s62, 1
        %s281 = smul.addr %s280, 64
        %s282 = scalar_lea.vmem [#allocation5], %s281
        %p283 = pneg %p75
        %p284 = pneg %p72
        %s285 = sand.u32 %s28, 1
        %s286 = scalar_lea.sflag [#allocation6], %s285
        %s287 = sand.u32 %s88, 1
        %s288 = smul.addr %s287, 64
        %s289 = scalar_lea.vmem [#allocation7], %s288
        %p290 = pneg %p101
        %p291 = pneg %p98
        %p292 = pneg %p127
        %p293 = pneg %p124
        %s294 = sand.u32 %s114, 1
        %s295 = scalar_lea.sflag [#allocation4], %s294
        %s296 = sand.u32 %s114, 1
        %s297 = smul.addr %s296, 32
        %s298 = scalar_lea.vmem [#allocation8], %s297
        %p299 = pneg %p153
        %p300 = pneg %p150
        %s301 = sand.u32 %s140, 1
        %s302 = scalar_lea.sflag [#allocation10], %s301
        %s303 = sand.u32 %s140, 1
        %s304 = smul.addr %s303, 32
        %s305 = scalar_lea.vmem [#allocation9], %s304
        %s306 = smul.u32 4, %s28
        %s307 = smul.u32 4, %s28
        %s308 = smul.u32 4, %s28
        %s309 = smul.u32 4, %s28
        %s310 = smul.u32 4, %s28
        %v311 = vld [vmem:[%s248] sm:$0xff]
        %v312 = vld [vmem:[%s248 + $0x8] sm:$0xff]
        %v313 = vld [vmem:[%s248 + $0x10] sm:$0xff]
        %v314 = vld [vmem:[%s248 + $0x18] sm:$0xff]
        %v315 = vld [vmem:[%s257] sm:$0xff]
        %v316 = vld [vmem:[%s257 + $0x8] sm:$0xff]
        %v317 = vld [vmem:[%s257 + $0x10] sm:$0xff]
        %v318 = vld [vmem:[%s257 + $0x18] sm:$0xff]
        %v319 = vld [vmem:[%s257 + $0x20] sm:$0xff]
        %v320 = vld [vmem:[%s257 + $0x28] sm:$0xff]
        %v321 = vld [vmem:[%s257 + $0x30] sm:$0xff]
        %v322 = vld [vmem:[%s257 + $0x38] sm:$0xff]
        %v323 = vld [vmem:[%s266] sm:$0xff]
        %v324 = vld [vmem:[%s266 + $0x8] sm:$0xff]
        %v325 = vld [vmem:[%s266 + $0x10] sm:$0xff]
        %v326 = vld [vmem:[%s266 + $0x18] sm:$0xff]
        %v327 = vld [vmem:[%s266 + $0x20] sm:$0xff]
        %v328 = vld [vmem:[%s266 + $0x28] sm:$0xff]
        %v329 = vld [vmem:[%s266 + $0x30] sm:$0xff]
        %v330 = vld [vmem:[%s266 + $0x38] sm:$0xff]
        %vm331 = vcmask 261120
        %v333 = vsel %vm331, %v311, 0
        %v336 = vsel %vm331, %v315, 0
        %v339 = vsel %vm331, %v316, 0
        %341 = vmatprep.subr.mxu0 0.0
        %342 = vmatpush1.xpose.msra.mxu0 %v336
        %343 = vmatprep.subr.mxu0 0.0
        %344 = vmatpush1.xpose.msra.mxu0 %v339
        %345 = vmatprep.subr.mxu0 0.0
        %346 = vmatpush1.xpose.msra.mxu0 0.0
        %347 = vmatprep.subr.mxu0 0.0
        %348 = vmatpush1.xpose.msra.mxu0 0.0
        %349 = vmatprep.subr.mxu0 0.0
        %350 = vmatpush1.xpose.msra.mxu0 0.0
        %351 = vmatprep.subr.mxu0 0.0
        %352 = vmatpush1.xpose.msra.mxu0 0.0
        %353 = vmatprep.subr.mxu0 0.0
        %354 = vmatpush1.xpose.msra.mxu0 0.0
        %355 = vmatprep.subr.mxu0 0.0
        %356 = vmatpush1.xpose.msra.mxu0 0.0
        %357 = vmatprep.subr.mxu0 0.0
        %358 = vmatpush1.xpose.msra.mxu0 0.0
        %359 = vmatprep.subr.mxu0 0.0
        %360 = vmatpush1.xpose.msra.mxu0 0.0
        %361 = vmatprep.subr.mxu0 0.0
        %362 = vmatpush1.xpose.msra.mxu0 0.0
        %363 = vmatprep.subr.mxu0 0.0
        %364 = vmatpush1.xpose.msra.mxu0 0.0
        %365 = vmatprep.subr.mxu0 0.0
        %366 = vmatpush1.xpose.msra.mxu0 0.0
        %367 = vmatprep.subr.mxu0 0.0
        %368 = vmatpush1.xpose.msra.mxu0 0.0
        %369 = vmatprep.subr.mxu0 0.0
        %370 = vmatpush1.xpose.msra.mxu0 0.0
        %371 = vmatprep.subr.mxu0 0.0
        %372 = vmatpush1.xpose.msra.mxu0 0.0
        %373 = vmatprep.subr.mxu0 0.0
        %374 = vmatpush1.xpose.msra.mxu0 0.0
        %375 = vmatprep.subr.mxu0 0.0
        %376 = vmatpush1.xpose.msra.mxu0 0.0
        %377 = vmatprep.subr.mxu0 0.0
        %378 = vmatpush1.xpose.msra.mxu0 0.0
        %379 = vmatprep.subr.mxu0 0.0
        %380 = vmatpush1.xpose.msra.mxu0 0.0
        %381 = vmatprep.subr.mxu0 0.0
        %382 = vmatpush1.xpose.msra.mxu0 0.0
        %383 = vmatprep.subr.mxu0 0.0
        %384 = vmatpush1.xpose.msra.mxu0 0.0
        %385 = vmatprep.subr.mxu0 0.0
        %386 = vmatpush1.xpose.msra.mxu0 0.0
        %387 = vmatprep.subr.mxu0 0.0
        %388 = vmatpush1.xpose.msra.mxu0 0.0
        %389 = vmatprep.subr.mxu0 0.0
        %390 = vmatpush1.xpose.msra.mxu0 0.0
        %391 = vmatprep.subr.mxu0 0.0
        %392 = vmatpush1.xpose.msra.mxu0 0.0
        %393 = vmatprep.subr.mxu0 0.0
        %394 = vmatpush1.xpose.msra.mxu0 0.0
        %395 = vmatprep.subr.mxu0 0.0
        %396 = vmatpush1.xpose.msra.mxu0 0.0
        %397 = vmatprep.subr.mxu0 0.0
        %398 = vmatpush1.xpose.msra.mxu0 0.0
        %399 = vmatprep.subr.mxu0 0.0
        %400 = vmatpush1.xpose.msra.mxu0 0.0
        %401 = vmatprep.subr.mxu0 0.0
        %402 = vmatpush1.xpose.msra.mxu0 0.0
        %403 = vmatprep.subr.mxu0 0.0
        %404 = vmatpush1.xpose.msra.mxu0 0.0
        %405 = vmatprep.mubr.f32.mxu0 0.0
        %406 = vmatmul.mubr.f32.gmra.mrb[0].mxu0 %v333
        %v407 = vpop.f32.mrb[0].mxu0
        %v408 = vadd.f32 0.0, %v407
        %v409 = vpop.f32.mrb[0].mxu0
        %410 = vdwg.mxu0
        %v412 = vsel %vm331, %v312, 0
        %v415 = vsel %vm331, %v317, 0
        %v418 = vsel %vm331, %v318, 0
        %420 = vmatprep.subr.mxu0 0.0
        %421 = vmatpush1.xpose.msra.mxu0 %v415
        %422 = vmatprep.subr.mxu0 0.0
        %423 = vmatpush1.xpose.msra.mxu0 %v418
        %424 = vmatprep.subr.mxu0 0.0
        %425 = vmatpush1.xpose.msra.mxu0 0.0
        %426 = vmatprep.subr.mxu0 0.0
        %427 = vmatpush1.xpose.msra.mxu0 0.0
        %428 = vmatprep.subr.mxu0 0.0
        %429 = vmatpush1.xpose.msra.mxu0 0.0
        %430 = vmatprep.subr.mxu0 0.0
        %431 = vmatpush1.xpose.msra.mxu0 0.0
        %432 = vmatprep.subr.mxu0 0.0
        %433 = vmatpush1.xpose.msra.mxu0 0.0
        %434 = vmatprep.subr.mxu0 0.0
        %435 = vmatpush1.xpose.msra.mxu0 0.0
        %436 = vmatprep.subr.mxu0 0.0
        %437 = vmatpush1.xpose.msra.mxu0 0.0
        %438 = vmatprep.subr.mxu0 0.0
        %439 = vmatpush1.xpose.msra.mxu0 0.0
        %440 = vmatprep.subr.mxu0 0.0
        %441 = vmatpush1.xpose.msra.mxu0 0.0
        %442 = vmatprep.subr.mxu0 0.0
        %443 = vmatpush1.xpose.msra.mxu0 0.0
        %444 = vmatprep.subr.mxu0 0.0
        %445 = vmatpush1.xpose.msra.mxu0 0.0
        %446 = vmatprep.subr.mxu0 0.0
        %447 = vmatpush1.xpose.msra.mxu0 0.0
        %448 = vmatprep.subr.mxu0 0.0
        %449 = vmatpush1.xpose.msra.mxu0 0.0
        %450 = vmatprep.subr.mxu0 0.0
        %451 = vmatpush1.xpose.msra.mxu0 0.0
        %452 = vmatprep.subr.mxu0 0.0
        %453 = vmatpush1.xpose.msra.mxu0 0.0
        %454 = vmatprep.subr.mxu0 0.0
        %455 = vmatpush1.xpose.msra.mxu0 0.0
        %456 = vmatprep.subr.mxu0 0.0
        %457 = vmatpush1.xpose.msra.mxu0 0.0
        %458 = vmatprep.subr.mxu0 0.0
        %459 = vmatpush1.xpose.msra.mxu0 0.0
        %460 = vmatprep.subr.mxu0 0.0
        %461 = vmatpush1.xpose.msra.mxu0 0.0
        %462 = vmatprep.subr.mxu0 0.0
        %463 = vmatpush1.xpose.msra.mxu0 0.0
        %464 = vmatprep.subr.mxu0 0.0
        %465 = vmatpush1.xpose.msra.mxu0 0.0
        %466 = vmatprep.subr.mxu0 0.0
        %467 = vmatpush1.xpose.msra.mxu0 0.0
        %468 = vmatprep.subr.mxu0 0.0
        %469 = vmatpush1.xpose.msra.mxu0 0.0
        %470 = vmatprep.subr.mxu0 0.0
        %471 = vmatpush1.xpose.msra.mxu0 0.0
        %472 = vmatprep.subr.mxu0 0.0
        %473 = vmatpush1.xpose.msra.mxu0 0.0
        %474 = vmatprep.subr.mxu0 0.0
        %475 = vmatpush1.xpose.msra.mxu0 0.0
        %476 = vmatprep.subr.mxu0 0.0
        %477 = vmatpush1.xpose.msra.mxu0 0.0
        %478 = vmatprep.subr.mxu0 0.0
        %479 = vmatpush1.xpose.msra.mxu0 0.0
        %480 = vmatprep.subr.mxu0 0.0
        %481 = vmatpush1.xpose.msra.mxu0 0.0
        %482 = vmatprep.subr.mxu0 0.0
        %483 = vmatpush1.xpose.msra.mxu0 0.0
        %484 = vmatprep.mubr.f32.mxu0 0.0
        %485 = vmatmul.mubr.f32.gmra.mrb[0].mxu0 %v412
        %v486 = vpop.f32.mrb[0].mxu0
        %v487 = vadd.f32 0.0, %v486
        %v488 = vpop.f32.mrb[0].mxu0
        %489 = vdwg.mxu0
        %v491 = vsel %vm331, %v313, 0
        %v494 = vsel %vm331, %v319, 0
        %v497 = vsel %vm331, %v320, 0
        %499 = vmatprep.subr.mxu0 0.0
        %500 = vmatpush1.xpose.msra.mxu0 %v494
        %501 = vmatprep.subr.mxu0 0.0
        %502 = vmatpush1.xpose.msra.mxu0 %v497
        %503 = vmatprep.subr.mxu0 0.0
        %504 = vmatpush1.xpose.msra.mxu0 0.0
        %505 = vmatprep.subr.mxu0 0.0
        %506 = vmatpush1.xpose.msra.mxu0 0.0
        %507 = vmatprep.subr.mxu0 0.0
        %508 = vmatpush1.xpose.msra.mxu0 0.0
        %509 = vmatprep.subr.mxu0 0.0
        %510 = vmatpush1.xpose.msra.mxu0 0.0
        %511 = vmatprep.subr.mxu0 0.0
        %512 = vmatpush1.xpose.msra.mxu0 0.0
        %513 = vmatprep.subr.mxu0 0.0
        %514 = vmatpush1.xpose.msra.mxu0 0.0
        %515 = vmatprep.subr.mxu0 0.0
        %516 = vmatpush1.xpose.msra.mxu0 0.0
        %517 = vmatprep.subr.mxu0 0.0
        %518 = vmatpush1.xpose.msra.mxu0 0.0
        %519 = vmatprep.subr.mxu0 0.0
        %520 = vmatpush1.xpose.msra.mxu0 0.0
        %521 = vmatprep.subr.mxu0 0.0
        %522 = vmatpush1.xpose.msra.mxu0 0.0
        %523 = vmatprep.subr.mxu0 0.0
        %524 = vmatpush1.xpose.msra.mxu0 0.0
        %525 = vmatprep.subr.mxu0 0.0
        %526 = vmatpush1.xpose.msra.mxu0 0.0
        %527 = vmatprep.subr.mxu0 0.0
        %528 = vmatpush1.xpose.msra.mxu0 0.0
        %529 = vmatprep.subr.mxu0 0.0
        %530 = vmatpush1.xpose.msra.mxu0 0.0
        %531 = vmatprep.subr.mxu0 0.0
        %532 = vmatpush1.xpose.msra.mxu0 0.0
        %533 = vmatprep.subr.mxu0 0.0
        %534 = vmatpush1.xpose.msra.mxu0 0.0
        %535 = vmatprep.subr.mxu0 0.0
        %536 = vmatpush1.xpose.msra.mxu0 0.0
        %537 = vmatprep.subr.mxu0 0.0
        %538 = vmatpush1.xpose.msra.mxu0 0.0
        %539 = vmatprep.subr.mxu0 0.0
        %540 = vmatpush1.xpose.msra.mxu0 0.0
        %541 = vmatprep.subr.mxu0 0.0
        %542 = vmatpush1.xpose.msra.mxu0 0.0
        %543 = vmatprep.subr.mxu0 0.0
        %544 = vmatpush1.xpose.msra.mxu0 0.0
        %545 = vmatprep.subr.mxu0 0.0
        %546 = vmatpush1.xpose.msra.mxu0 0.0
        %547 = vmatprep.subr.mxu0 0.0
        %548 = vmatpush1.xpose.msra.mxu0 0.0
        %549 = vmatprep.subr.mxu0 0.0
        %550 = vmatpush1.xpose.msra.mxu0 0.0
        %551 = vmatprep.subr.mxu0 0.0
        %552 = vmatpush1.xpose.msra.mxu0 0.0
        %553 = vmatprep.subr.mxu0 0.0
        %554 = vmatpush1.xpose.msra.mxu0 0.0
        %555 = vmatprep.subr.mxu0 0.0
        %556 = vmatpush1.xpose.msra.mxu0 0.0
        %557 = vmatprep.subr.mxu0 0.0
        %558 = vmatpush1.xpose.msra.mxu0 0.0
        %559 = vmatprep.subr.mxu0 0.0
        %560 = vmatpush1.xpose.msra.mxu0 0.0
        %561 = vmatprep.subr.mxu0 0.0
        %562 = vmatpush1.xpose.msra.mxu0 0.0
        %563 = vmatprep.mubr.f32.mxu0 0.0
        %564 = vmatmul.mubr.f32.gmra.mrb[0].mxu0 %v491
        %v565 = vpop.f32.mrb[0].mxu0
        %v566 = vadd.f32 0.0, %v565
        %v567 = vpop.f32.mrb[0].mxu0
        %568 = vdwg.mxu0
        %v570 = vsel %vm331, %v314, 0
        %v573 = vsel %vm331, %v321, 0
        %v576 = vsel %vm331, %v322, 0
        %578 = vmatprep.subr.mxu0 0.0
        %579 = vmatpush1.xpose.msra.mxu0 %v573
        %580 = vmatprep.subr.mxu0 0.0
        %581 = vmatpush1.xpose.msra.mxu0 %v576
        %582 = vmatprep.subr.mxu0 0.0
        %583 = vmatpush1.xpose.msra.mxu0 0.0
        %584 = vmatprep.subr.mxu0 0.0
        %585 = vmatpush1.xpose.msra.mxu0 0.0
        %586 = vmatprep.subr.mxu0 0.0
        %587 = vmatpush1.xpose.msra.mxu0 0.0
        %588 = vmatprep.subr.mxu0 0.0
        %589 = vmatpush1.xpose.msra.mxu0 0.0
        %590 = vmatprep.subr.mxu0 0.0
        %591 = vmatpush1.xpose.msra.mxu0 0.0
        %592 = vmatprep.subr.mxu0 0.0
        %593 = vmatpush1.xpose.msra.mxu0 0.0
        %594 = vmatprep.subr.mxu0 0.0
        %595 = vmatpush1.xpose.msra.mxu0 0.0
        %596 = vmatprep.subr.mxu0 0.0
        %597 = vmatpush1.xpose.msra.mxu0 0.0
        %598 = vmatprep.subr.mxu0 0.0
        %599 = vmatpush1.xpose.msra.mxu0 0.0
        %600 = vmatprep.subr.mxu0 0.0
        %601 = vmatpush1.xpose.msra.mxu0 0.0
        %602 = vmatprep.subr.mxu0 0.0
        %603 = vmatpush1.xpose.msra.mxu0 0.0
        %604 = vmatprep.subr.mxu0 0.0
        %605 = vmatpush1.xpose.msra.mxu0 0.0
        %606 = vmatprep.subr.mxu0 0.0
        %607 = vmatpush1.xpose.msra.mxu0 0.0
        %608 = vmatprep.subr.mxu0 0.0
        %609 = vmatpush1.xpose.msra.mxu0 0.0
        %610 = vmatprep.subr.mxu0 0.0
        %611 = vmatpush1.xpose.msra.mxu0 0.0
        %612 = vmatprep.subr.mxu0 0.0
        %613 = vmatpush1.xpose.msra.mxu0 0.0
        %614 = vmatprep.subr.mxu0 0.0
        %615 = vmatpush1.xpose.msra.mxu0 0.0
        %616 = vmatprep.subr.mxu0 0.0
        %617 = vmatpush1.xpose.msra.mxu0 0.0
        %618 = vmatprep.subr.mxu0 0.0
        %619 = vmatpush1.xpose.msra.mxu0 0.0
        %620 = vmatprep.subr.mxu0 0.0
        %621 = vmatpush1.xpose.msra.mxu0 0.0
        %622 = vmatprep.subr.mxu0 0.0
        %623 = vmatpush1.xpose.msra.mxu0 0.0
        %624 = vmatprep.subr.mxu0 0.0
        %625 = vmatpush1.xpose.msra.mxu0 0.0
        %626 = vmatprep.subr.mxu0 0.0
        %627 = vmatpush1.xpose.msra.mxu0 0.0
        %628 = vmatprep.subr.mxu0 0.0
        %629 = vmatpush1.xpose.msra.mxu0 0.0
        %630 = vmatprep.subr.mxu0 0.0
        %631 = vmatpush1.xpose.msra.mxu0 0.0
        %632 = vmatprep.subr.mxu0 0.0
        %633 = vmatpush1.xpose.msra.mxu0 0.0
        %634 = vmatprep.subr.mxu0 0.0
        %635 = vmatpush1.xpose.msra.mxu0 0.0
        %636 = vmatprep.subr.mxu0 0.0
        %637 = vmatpush1.xpose.msra.mxu0 0.0
        %638 = vmatprep.subr.mxu0 0.0
        %639 = vmatpush1.xpose.msra.mxu0 0.0
        %640 = vmatprep.subr.mxu0 0.0
        %641 = vmatpush1.xpose.msra.mxu0 0.0
        %642 = vmatprep.mubr.f32.mxu0 0.0
        %643 = vmatmul.mubr.f32.gmra.mrb[0].mxu0 %v570
        %v644 = vpop.f32.mrb[0].mxu0
        %v645 = vadd.f32 0.0, %v644
        %v646 = vpop.f32.mrb[0].mxu0
        %647 = vdwg.mxu0
        %v648 = vmul.f32 %v408, 0.17677669
        %v649 = vmul.f32 %v487, 0.17677669
        %v650 = vmul.f32 %v566, 0.17677669
        %v651 = vmul.f32 %v645, 0.17677669
        %vm652 = vcmask 130048
        %v653 = vsel %vm652, %v648, -inf
        %654 = vmax.xlane.f32.xlu0 %v653
        %v655 = vpop.xlane.xlu0 %654
        %v656 = vsel %vm652, %v649, -inf
        %657 = vmax.xlane.f32.xlu0 %v656
        %v658 = vpop.xlane.xlu0 %657
        %v659 = vsel %vm652, %v650, -inf
        %660 = vmax.xlane.f32.xlu0 %v659
        %v661 = vpop.xlane.xlu0 %660
        %v662 = vsel %vm652, %v651, -inf
        %663 = vmax.xlane.f32.xlu0 %v662
        %v664 = vpop.xlane.xlu0 %663
        %v665 = vsub.f32 %v648, %v655
        %v666 = vsub.f32 %v649, %v658
        %v667 = vsub.f32 %v650, %v661
        %v668 = vsub.f32 %v651, %v664
        %v669 = vmul.f32 %v665, 1.442695
        %v670 = vpow.pop %v669
        %v671 = vmul.f32 %v666, 1.442695
        %v672 = vpow.pop %v671
        %v673 = vmul.f32 %v667, 1.442695
        %v674 = vpow.pop %v673
        %v675 = vmul.f32 %v668, 1.442695
        %v676 = vpow.pop %v675
        %v677 = vsel %vm652, %v670, 0.0
        %678 = vadd.xlane.f32.xlu0 %v677
        %v679 = vpop.xlane.xlu0 %678
        %v680 = vsel %vm652, %v672, 0.0
        %681 = vadd.xlane.f32.xlu0 %v680
        %v682 = vpop.xlane.xlu0 %681
        %v683 = vsel %vm652, %v674, 0.0
        %684 = vadd.xlane.f32.xlu0 %v683
        %v685 = vpop.xlane.xlu0 %684
        %v686 = vsel %vm652, %v676, 0.0
        %687 = vadd.xlane.f32.xlu0 %v686
        %v688 = vpop.xlane.xlu0 %687
        %v689 = vrcp.pop %v679
        %v690 = vrcp.pop %v682
        %v691 = vrcp.pop %v685
        %v692 = vrcp.pop %v688
        %v694 = vsel %vm652, %v670, 0
        %696 = vmatprep.subr.mxu0 0.0
        %697 = vmatpush1.msra.mxu0 %v323
        %698 = vmatprep.subr.mxu0 0.0
        %699 = vmatpush1.msra.mxu0 %v324
        %700 = vmatprep.subr.mxu0 0.0
        %701 = vmatpush1.msra.mxu0 0.0
        %702 = vmatprep.subr.mxu0 0.0
        %703 = vmatpush1.msra.mxu0 0.0
        %704 = vmatprep.subr.mxu0 0.0
        %705 = vmatpush1.msra.mxu0 0.0
        %706 = vmatprep.subr.mxu0 0.0
        %707 = vmatpush1.msra.mxu0 0.0
        %708 = vmatprep.subr.mxu0 0.0
        %709 = vmatpush1.msra.mxu0 0.0
        %710 = vmatprep.subr.mxu0 0.0
        %711 = vmatpush1.msra.mxu0 0.0
        %712 = vmatprep.subr.mxu0 0.0
        %713 = vmatpush1.msra.mxu0 0.0
        %714 = vmatprep.subr.mxu0 0.0
        %715 = vmatpush1.msra.mxu0 0.0
        %716 = vmatprep.subr.mxu0 0.0
        %717 = vmatpush1.msra.mxu0 0.0
        %718 = vmatprep.subr.mxu0 0.0
        %719 = vmatpush1.msra.mxu0 0.0
        %720 = vmatprep.subr.mxu0 0.0
        %721 = vmatpush1.msra.mxu0 0.0
        %722 = vmatprep.subr.mxu0 0.0
        %723 = vmatpush1.msra.mxu0 0.0
        %724 = vmatprep.subr.mxu0 0.0
        %725 = vmatpush1.msra.mxu0 0.0
        %726 = vmatprep.subr.mxu0 0.0
        %727 = vmatpush1.msra.mxu0 0.0
        %728 = vmatprep.subr.mxu0 0.0
        %729 = vmatpush1.msra.mxu0 0.0
        %730 = vmatprep.subr.mxu0 0.0
        %731 = vmatpush1.msra.mxu0 0.0
        %732 = vmatprep.subr.mxu0 0.0
        %733 = vmatpush1.msra.mxu0 0.0
        %734 = vmatprep.subr.mxu0 0.0
        %735 = vmatpush1.msra.mxu0 0.0
        %736 = vmatprep.subr.mxu0 0.0
        %737 = vmatpush1.msra.mxu0 0.0
        %738 = vmatprep.subr.mxu0 0.0
        %739 = vmatpush1.msra.mxu0 0.0
        %740 = vmatprep.subr.mxu0 0.0
        %741 = vmatpush1.msra.mxu0 0.0
        %742 = vmatprep.subr.mxu0 0.0
        %743 = vmatpush1.msra.mxu0 0.0
        %744 = vmatprep.subr.mxu0 0.0
        %745 = vmatpush1.msra.mxu0 0.0
        %746 = vmatprep.subr.mxu0 0.0
        %747 = vmatpush1.msra.mxu0 0.0
        %748 = vmatprep.subr.mxu0 0.0
        %749 = vmatpush1.msra.mxu0 0.0
        %750 = vmatprep.subr.mxu0 0.0
        %751 = vmatpush1.msra.mxu0 0.0
        %752 = vmatprep.subr.mxu0 0.0
        %753 = vmatpush1.msra.mxu0 0.0
        %754 = vmatprep.subr.mxu0 0.0
        %755 = vmatpush1.msra.mxu0 0.0
        %756 = vmatprep.subr.mxu0 0.0
        %757 = vmatpush1.msra.mxu0 0.0
        %758 = vmatprep.subr.mxu0 0.0
        %759 = vmatpush1.msra.mxu0 0.0
        %760 = vmatprep.mubr.f32.mxu0 0.0
        %761 = vmatmul.mubr.f32.gmra.mrb[0].mxu0 %v694
        %v762 = vpop.f32.mrb[0].mxu0
        %v763 = vadd.f32 0.0, %v762
        %v764 = vpop.f32.mrb[0].mxu0
        %765 = vdwg.mxu0
        %v767 = vsel %vm652, %v672, 0
        %769 = vmatprep.subr.mxu0 0.0
        %770 = vmatpush1.msra.mxu0 %v325
        %771 = vmatprep.subr.mxu0 0.0
        %772 = vmatpush1.msra.mxu0 %v326
        %773 = vmatprep.subr.mxu0 0.0
        %774 = vmatpush1.msra.mxu0 0.0
        %775 = vmatprep.subr.mxu0 0.0
        %776 = vmatpush1.msra.mxu0 0.0
        %777 = vmatprep.subr.mxu0 0.0
        %778 = vmatpush1.msra.mxu0 0.0
        %779 = vmatprep.subr.mxu0 0.0
        %780 = vmatpush1.msra.mxu0 0.0
        %781 = vmatprep.subr.mxu0 0.0
        %782 = vmatpush1.msra.mxu0 0.0
        %783 = vmatprep.subr.mxu0 0.0
        %784 = vmatpush1.msra.mxu0 0.0
        %785 = vmatprep.subr.mxu0 0.0
        %786 = vmatpush1.msra.mxu0 0.0
        %787 = vmatprep.subr.mxu0 0.0
        %788 = vmatpush1.msra.mxu0 0.0
        %789 = vmatprep.subr.mxu0 0.0
        %790 = vmatpush1.msra.mxu0 0.0
        %791 = vmatprep.subr.mxu0 0.0
        %792 = vmatpush1.msra.mxu0 0.0
        %793 = vmatprep.subr.mxu0 0.0
        %794 = vmatpush1.msra.mxu0 0.0
        %795 = vmatprep.subr.mxu0 0.0
        %796 = vmatpush1.msra.mxu0 0.0
        %797 = vmatprep.subr.mxu0 0.0
        %798 = vmatpush1.msra.mxu0 0.0
        %799 = vmatprep.subr.mxu0 0.0
        %800 = vmatpush1.msra.mxu0 0.0
        %801 = vmatprep.subr.mxu0 0.0
        %802 = vmatpush1.msra.mxu0 0.0
        %803 = vmatprep.subr.mxu0 0.0
        %804 = vmatpush1.msra.mxu0 0.0
        %805 = vmatprep.subr.mxu0 0.0
        %806 = vmatpush1.msra.mxu0 0.0
        %807 = vmatprep.subr.mxu0 0.0
        %808 = vmatpush1.msra.mxu0 0.0
        %809 = vmatprep.subr.mxu0 0.0
        %810 = vmatpush1.msra.mxu0 0.0
        %811 = vmatprep.subr.mxu0 0.0
        %812 = vmatpush1.msra.mxu0 0.0
        %813 = vmatprep.subr.mxu0 0.0
        %814 = vmatpush1.msra.mxu0 0.0
        %815 = vmatprep.subr.mxu0 0.0
        %816 = vmatpush1.msra.mxu0 0.0
        %817 = vmatprep.subr.mxu0 0.0
        %818 = vmatpush1.msra.mxu0 0.0
        %819 = vmatprep.subr.mxu0 0.0
        %820 = vmatpush1.msra.mxu0 0.0
        %821 = vmatprep.subr.mxu0 0.0
        %822 = vmatpush1.msra.mxu0 0.0
        %823 = vmatprep.subr.mxu0 0.0
        %824 = vmatpush1.msra.mxu0 0.0
        %825 = vmatprep.subr.mxu0 0.0
        %826 = vmatpush1.msra.mxu0 0.0
        %827 = vmatprep.subr.mxu0 0.0
        %828 = vmatpush1.msra.mxu0 0.0
        %829 = vmatprep.subr.mxu0 0.0
        %830 = vmatpush1.msra.mxu0 0.0
        %831 = vmatprep.subr.mxu0 0.0
        %832 = vmatpush1.msra.mxu0 0.0
        %833 = vmatprep.mubr.f32.mxu0 0.0
        %834 = vmatmul.mubr.f32.gmra.mrb[0].mxu0 %v767
        %v835 = vpop.f32.mrb[0].mxu0
        %v836 = vadd.f32 0.0, %v835
        %v837 = vpop.f32.mrb[0].mxu0
        %838 = vdwg.mxu0
        %v840 = vsel %vm652, %v674, 0
        %842 = vmatprep.subr.mxu0 0.0
        %843 = vmatpush1.msra.mxu0 %v327
        %844 = vmatprep.subr.mxu0 0.0
        %845 = vmatpush1.msra.mxu0 %v328
        %846 = vmatprep.subr.mxu0 0.0
        %847 = vmatpush1.msra.mxu0 0.0
        %848 = vmatprep.subr.mxu0 0.0
        %849 = vmatpush1.msra.mxu0 0.0
        %850 = vmatprep.subr.mxu0 0.0
        %851 = vmatpush1.msra.mxu0 0.0
        %852 = vmatprep.subr.mxu0 0.0
        %853 = vmatpush1.msra.mxu0 0.0
        %854 = vmatprep.subr.mxu0 0.0
        %855 = vmatpush1.msra.mxu0 0.0
        %856 = vmatprep.subr.mxu0 0.0
        %857 = vmatpush1.msra.mxu0 0.0
        %858 = vmatprep.subr.mxu0 0.0
        %859 = vmatpush1.msra.mxu0 0.0
        %860 = vmatprep.subr.mxu0 0.0
        %861 = vmatpush1.msra.mxu0 0.0
        %862 = vmatprep.subr.mxu0 0.0
        %863 = vmatpush1.msra.mxu0 0.0
        %864 = vmatprep.subr.mxu0 0.0
        %865 = vmatpush1.msra.mxu0 0.0
        %866 = vmatprep.subr.mxu0 0.0
        %867 = vmatpush1.msra.mxu0 0.0
        %868 = vmatprep.subr.mxu0 0.0
        %869 = vmatpush1.msra.mxu0 0.0
        %870 = vmatprep.subr.mxu0 0.0
        %871 = vmatpush1.msra.mxu0 0.0
        %872 = vmatprep.subr.mxu0 0.0
        %873 = vmatpush1.msra.mxu0 0.0
        %874 = vmatprep.subr.mxu0 0.0
        %875 = vmatpush1.msra.mxu0 0.0
        %876 = vmatprep.subr.mxu0 0.0
        %877 = vmatpush1.msra.mxu0 0.0
        %878 = vmatprep.subr.mxu0 0.0
        %879 = vmatpush1.msra.mxu0 0.0
        %880 = vmatprep.subr.mxu0 0.0
        %881 = vmatpush1.msra.mxu0 0.0
        %882 = vmatprep.subr.mxu0 0.0
        %883 = vmatpush1.msra.mxu0 0.0
        %884 = vmatprep.subr.mxu0 0.0
        %885 = vmatpush1.msra.mxu0 0.0
        %886 = vmatprep.subr.mxu0 0.0
        %887 = vmatpush1.msra.mxu0 0.0
        %888 = vmatprep.subr.mxu0 0.0
        %889 = vmatpush1.msra.mxu0 0.0
        %890 = vmatprep.subr.mxu0 0.0
        %891 = vmatpush1.msra.mxu0 0.0
        %892 = vmatprep.subr.mxu0 0.0
        %893 = vmatpush1.msra.mxu0 0.0
        %894 = vmatprep.subr.mxu0 0.0
        %895 = vmatpush1.msra.mxu0 0.0
        %896 = vmatprep.subr.mxu0 0.0
        %897 = vmatpush1.msra.mxu0 0.0
        %898 = vmatprep.subr.mxu0 0.0
        %899 = vmatpush1.msra.mxu0 0.0
        %900 = vmatprep.subr.mxu0 0.0
        %901 = vmatpush1.msra.mxu0 0.0
        %902 = vmatprep.subr.mxu0 0.0
        %903 = vmatpush1.msra.mxu0 0.0
        %904 = vmatprep.subr.mxu0 0.0
        %905 = vmatpush1.msra.mxu0 0.0
        %906 = vmatprep.mubr.f32.mxu0 0.0
        %907 = vmatmul.mubr.f32.gmra.mrb[0].mxu0 %v840
        %v908 = vpop.f32.mrb[0].mxu0
        %v909 = vadd.f32 0.0, %v908
        %v910 = vpop.f32.mrb[0].mxu0
        %911 = vdwg.mxu0
        %v913 = vsel %vm652, %v676, 0
        %915 = vmatprep.subr.mxu0 0.0
        %916 = vmatpush1.msra.mxu0 %v329
        %917 = vmatprep.subr.mxu0 0.0
        %918 = vmatpush1.msra.mxu0 %v330
        %919 = vmatprep.subr.mxu0 0.0
        %920 = vmatpush1.msra.mxu0 0.0
        %921 = vmatprep.subr.mxu0 0.0
        %922 = vmatpush1.msra.mxu0 0.0
        %923 = vmatprep.subr.mxu0 0.0
        %924 = vmatpush1.msra.mxu0 0.0
        %925 = vmatprep.subr.mxu0 0.0
        %926 = vmatpush1.msra.mxu0 0.0
        %927 = vmatprep.subr.mxu0 0.0
        %928 = vmatpush1.msra.mxu0 0.0
        %929 = vmatprep.subr.mxu0 0.0
        %930 = vmatpush1.msra.mxu0 0.0
        %931 = vmatprep.subr.mxu0 0.0
        %932 = vmatpush1.msra.mxu0 0.0
        %933 = vmatprep.subr.mxu0 0.0
        %934 = vmatpush1.msra.mxu0 0.0
        %935 = vmatprep.subr.mxu0 0.0
        %936 = vmatpush1.msra.mxu0 0.0
        %937 = vmatprep.subr.mxu0 0.0
        %938 = vmatpush1.msra.mxu0 0.0
        %939 = vmatprep.subr.mxu0 0.0
        %940 = vmatpush1.msra.mxu0 0.0
        %941 = vmatprep.subr.mxu0 0.0
        %942 = vmatpush1.msra.mxu0 0.0
        %943 = vmatprep.subr.mxu0 0.0
        %944 = vmatpush1.msra.mxu0 0.0
        %945 = vmatprep.subr.mxu0 0.0
        %946 = vmatpush1.msra.mxu0 0.0
        %947 = vmatprep.subr.mxu0 0.0
        %948 = vmatpush1.msra.mxu0 0.0
        %949 = vmatprep.subr.mxu0 0.0
        %950 = vmatpush1.msra.mxu0 0.0
        %951 = vmatprep.subr.mxu0 0.0
        %952 = vmatpush1.msra.mxu0 0.0
        %953 = vmatprep.subr.mxu0 0.0
        %954 = vmatpush1.msra.mxu0 0.0
        %955 = vmatprep.subr.mxu0 0.0
        %956 = vmatpush1.msra.mxu0 0.0
        %957 = vmatprep.subr.mxu0 0.0
        %958 = vmatpush1.msra.mxu0 0.0
        %959 = vmatprep.subr.mxu0 0.0
        %960 = vmatpush1.msra.mxu0 0.0
        %961 = vmatprep.subr.mxu0 0.0
        %962 = vmatpush1.msra.mxu0 0.0
        %963 = vmatprep.subr.mxu0 0.0
        %964 = vmatpush1.msra.mxu0 0.0
        %965 = vmatprep.subr.mxu0 0.0
        %966 = vmatpush1.msra.mxu0 0.0
        %967 = vmatprep.subr.mxu0 0.0
        %968 = vmatpush1.msra.mxu0 0.0
        %969 = vmatprep.subr.mxu0 0.0
        %970 = vmatpush1.msra.mxu0 0.0
        %971 = vmatprep.subr.mxu0 0.0
        %972 = vmatpush1.msra.mxu0 0.0
        %973 = vmatprep.subr.mxu0 0.0
        %974 = vmatpush1.msra.mxu0 0.0
        %975 = vmatprep.subr.mxu0 0.0
        %976 = vmatpush1.msra.mxu0 0.0
        %977 = vmatprep.subr.mxu0 0.0
        %978 = vmatpush1.msra.mxu0 0.0
        %979 = vmatprep.mubr.f32.mxu0 0.0
        %980 = vmatmul.mubr.f32.gmra.mrb[0].mxu0 %v913
        %v981 = vpop.f32.mrb[0].mxu0
        %v982 = vadd.f32 0.0, %v981
        %v983 = vpop.f32.mrb[0].mxu0
        %984 = vdwg.mxu0
        %v985 = vmul.f32 %v763, %v689
        %v986 = vmul.f32 %v836, %v690
        %v987 = vmul.f32 %v909, %v691
        %v988 = vmul.f32 %v982, %v692
        %989 = vst.msk [vmem:[%s298] sm:$0xff] %vm331, %v985
        %990 = vst.msk [vmem:[%s298 + $0x8] sm:$0xff] %vm331, %v986
        %991 = vst.msk [vmem:[%s298 + $0x10] sm:$0xff] %vm331, %v987
        %992 = vst.msk [vmem:[%s298 + $0x18] sm:$0xff] %vm331, %v988
        %v993 = vmul.f32 %v670, %v689
        %v994 = vmul.f32 %v672, %v690
        %v995 = vmul.f32 %v674, %v691
        %v996 = vmul.f32 %v676, %v692
        %997 = vst.msk [vmem:[%s305] sm:$0xff] %vm652, %v993
        %998 = vst.msk [vmem:[%s305 + $0x8] sm:$0xff] %vm652, %v994
        %999 = vst.msk [vmem:[%s305 + $0x10] sm:$0xff] %vm652, %v995
        %1000 = vst.msk [vmem:[%s305 + $0x18] sm:$0xff] %vm652, %v996
        %s1001 = sand.u32 %s114, 1
        %s1002 = scalar_lea.sflag [#allocation4], %s1001
        %s1003 = sand.u32 %s114, 1
        %s1004 = smul.addr %s1003, 32
        %s1005 = scalar_lea.vmem [#allocation8], %s1004
        %s1006 = sand.u32 %s140, 1
        %s1007 = scalar_lea.sflag [#allocation10], %s1006
        %s1008 = sand.u32 %s140, 1
        %s1009 = smul.addr %s1008, 32
        %s1010 = scalar_lea.vmem [#allocation9], %s1009
        // Predicated region
        $region45: #{word_attention.1} parent=31 // pred_check
          %p1011 = pneg %p124
        $region46: #{word_attention.1} parent=31 // pred_check_branch
          %1013 = sbr.rel (%p1011) target = $region48
        $region47: #{word_attention.1} parent=31 // pred_region
          %s1014 = smul.u32 4, %s28
          %s1016 = ssub.s32 512, 512
          %1017 = vsyncadd %s1002, %s1016
          %s1018 = smul.addr %s1014, 128
          %s1019 = scalar_lea.hbm %s3, %s1018
          %s1020 = sshll.u32 %s1005, 4
          %s1021 = int_to_ptr.vmem [resolvable:$true] %s1020
          %1026 = dma.vmem_to_hbm [thread:$0]  %s1021, 512, %s1019, %s1002, 128, 128, 8
        $region48: #{word_attention.1} parent=31 // pred_fallthru
          _
        // Predicated region
        $region49: #{word_attention.1} parent=31 // pred_check
          %p1027 = pneg %p150
        $region50: #{word_attention.1} parent=31 // pred_check_branch
          %1029 = sbr.rel (%p1027) target = $region52
        $region51: #{word_attention.1} parent=31 // pred_region
          %s1030 = smul.u32 4, %s28
          %s1032 = ssub.s32 512, 512
          %1033 = vsyncadd %s1007, %s1032
          %s1034 = smul.addr %s1030, 128
          %s1035 = scalar_lea.hbm %s4, %s1034
          %s1036 = sshll.u32 %s1010, 4
          %s1037 = int_to_ptr.vmem [resolvable:$true] %s1036
          %1042 = dma.vmem_to_hbm [thread:$0]  %s1037, 512, %s1035, %s1007, 128, 128, 8
        $region52: #{word_attention.1} parent=31 // pred_fallthru
          _
      $region32: #{word_attention.1} parent=5 // pred_fallthru
        _
      %p1043 = scmp.le.s32.totalorder 2, %s23
      // Predicated region
      $region53: #{word_attention.1} parent=5 // pred_check
        %p1044 = pneg %p1043
      $region54: #{word_attention.1} parent=5 // pred_check_branch
        %1046 = sbr.rel (%p1044) target = $region56
      $region55: #{word_attention.1} parent=5 // pred_region
        %s1047 = ssub.s32 %s23, 2
        // Predicated region
        $region57: #{word_attention.1} parent=55 // pred_check
          %p1048 = pneg %p130
        $region58: #{word_attention.1} parent=55 // pred_check_branch
          %1050 = sbr.rel (%p1048) target = $region60
        $region59: #{word_attention.1} parent=55 // pred_region
          %s1051 = sand.u32 %s115, 1
          %s1052 = scalar_lea.sflag [#allocation4], %s1051
          %s1053 = sand.u32 %s115, 1
          %s1054 = smul.addr %s1053, 32
          %s1055 = scalar_lea.vmem [#allocation8], %s1054
          %1056 = dma.done %s1052, 512
        $region60: #{word_attention.1} parent=55 // pred_fallthru
          _
        // Predicated region
        $region61: #{word_attention.1} parent=55 // pred_check
          %p1057 = pneg %p156
        $region62: #{word_attention.1} parent=55 // pred_check_branch
          %1059 = sbr.rel (%p1057) target = $region64
        $region63: #{word_attention.1} parent=55 // pred_region
          %s1060 = sand.u32 %s141, 1
          %s1061 = scalar_lea.sflag [#allocation10], %s1060
          %s1062 = sand.u32 %s141, 1
          %s1063 = smul.addr %s1062, 32
          %s1064 = scalar_lea.vmem [#allocation9], %s1063
          %1065 = dma.done %s1061, 512
        $region64: #{word_attention.1} parent=55 // pred_fallthru
          _
      $region56: #{word_attention.1} parent=5 // pred_fallthru
        _
    $region6: #{word_attention.1} parent=1 // loop_footer
      %s27 = sadd.s32 1, %s23
    $region7: #{word_attention.1} parent=1 // loop_footer_branch
      %22 = sbr.rel target = $region3
    $region8: #{word_attention.1} parent=1 // loop_exit
      _
    %1066 = vsyncpa [#allocation3], 1
    %s1067 = scalar_lea.sflag [#allocation3], 1
    %1068 = vsyncpa %s1067, 1
    %1069 = vsyncpa [#allocation6], 1
    %s1070 = scalar_lea.sflag [#allocation6], 1
    %1071 = vsyncpa %s1070, 1
    %1072 = vsyncpa [#allocation4], 1
    %s1073 = scalar_lea.sflag [#allocation4], 1
    %1074 = vsyncpa %s1073, 1
    %1075 = vsyncpa [#allocation10], 1
    %s1076 = scalar_lea.sflag [#allocation10], 1
    %1077 = vsyncpa %s1076, 1

</llo_original>
